<compile_context>
chip_gen: v5e
topology: v5e:2x2
jax: 0.10.0
libtpu: 0.0.40
codegen_flags: <defaults>
</compile_context>

<pallas_src>
import jax
import jax.numpy as jnp
from jax.experimental import pallas as pl
from jax.experimental.pallas import tpu as pltpu


# ---------------------------------------------------------------------------
# Kernel
# ---------------------------------------------------------------------------
def sa_kernel(x_ref, w_ref, b_ref, o_ref):
    """x_ref/o_ref: (Bt, Ct*S); w_ref: (1, Ct*S, Ct*S) bf16 block-diag fold of the
    depthwise taps; b_ref: (1, Ct*S) f32 bias broadcast over the S lanes."""
    x = x_ref[...]                                   # native dtype, lane-dense load
    # Depthwise conv for every (row, channel) of this tile at once: the
    # block-diagonal weight both reduces over the S spatial taps of each channel
    # and broadcasts the result back to those S lanes.  bf16 operands -> native
    # single-pass MXU; f32 accumulate keeps the 4-tap sum at full precision.
    y = jnp.dot(x.astype(jnp.bfloat16), w_ref[0],
                preferred_element_type=jnp.float32) + b_ref[...]
    if x.dtype == jnp.bfloat16:
        # v6e/v7x: native bf16 VPU — keep x in bf16, cast y down once.
        o_ref[...] = x * y.astype(jnp.bfloat16)
    else:
        o_ref[...] = (x.astype(jnp.float32) * y).astype(o_ref.dtype)


# ---------------------------------------------------------------------------
# Generation-aware sizing helpers
# ---------------------------------------------------------------------------
def _vmem_capacity_bytes():
    """Physical VMEM per TensorCore; 128 MiB fallback if the query is unavailable."""
    try:
        info = pltpu.get_tpu_info()
        return int(getattr(info, "vmem_capacity_bytes", 128 << 20))
    except Exception:
        return 128 << 20


def _pick_channel_tile(C, S):
    """Channels per grid step.  Keeps the resident diagonal weight block small
    (<= (512)^2 elements) while keeping the x/out block last dim lane-aligned
    (multiple of 128) or equal to the full C*S extent."""
    if C * S <= 512:
        return C                                  # single resident block (test case)
    best = 0
    for ct in range(1, C + 1):                    # largest lane-aligned divisor
        if C % ct == 0 and ct * S <= 512 and (ct * S) % 128 == 0:
            best = ct
    return best if best else C                    # fallback: full channel extent


def _pick_batch_tile(n_rows, row_bytes, small_vmem):
    """Rows per grid step.  Big enough to amortize ~0.35us/step overhead and emit
    long contiguous DMAs; small enough that double-buffered in+out blocks stay far
    below the scoped VMEM limit.  Only on v7x (2 TensorCores) do we force >= 2
    batch steps so both cores get work — on v5e/v6e that split is pure overhead."""
    budget = (4 << 20) if small_vmem else (12 << 20)
    bt = max(8, budget // max(1, row_bytes))
    if small_vmem and n_rows >= 16:
        bt = min(bt, -(-n_rows // 2))             # >= 2 balanced steps (v7x only)
    if bt >= n_rows:
        return n_rows                             # single full-height block
    return max(8, (bt // 8) * 8)                  # sublane-aligned tile


# ---------------------------------------------------------------------------
# Parameter prep (call once; independent of the batch / per-call path)
# ---------------------------------------------------------------------------
def prepare_sa_params(weight, bias, H, W, channel_tile):
    """Fold the depthwise 3x3 / stride-2 / pad-1 taps that hit real pixels of the
    single (0,0) output into per-channel-tile block-diagonal bf16 matrices, plus
    the f32 bias broadcast over the S spatial lanes."""
    C = weight.shape[0]
    S = H * W
    Ct = channel_tile
    n_ct = C // Ct
    wtap = weight[:, 0, 1:1 + H, 1:1 + W].reshape(C, S)              # (C, S)
    # blk[t, i, s, s'] = wtap[t*Ct + i, s]  (broadcast over output lane s')
    blk = jnp.broadcast_to(wtap[:, :, None], (C, S, S)).reshape(n_ct, Ct, S, S)
    eye = jnp.eye(Ct, dtype=wtap.dtype)
    w5 = blk[:, :, None, :, :] * eye[None, :, :, None, None]         # (n_ct, Ct, Ct, S, S)
    wblocks = w5.transpose(0, 1, 3, 2, 4).reshape(n_ct, Ct * S, Ct * S)
    wblocks = wblocks.astype(jnp.bfloat16)        # native single-pass MXU operand
    bvec = jnp.repeat(bias.astype(jnp.float32), S).reshape(1, C * S)
    return wblocks, bvec


# ---------------------------------------------------------------------------
# Wrapper
# ---------------------------------------------------------------------------
def sa_layer(x_nchw, weight, bias, *, params=None, channel_tile=None):
    """SALayer forward.  x: (N, C, H, W) NCHW, weight: (C, 1, 3, 3), bias: (C,).
    Pass `params=prepare_sa_params(...)` to amortize weight prep across calls."""
    N, C, H, W = x_nchw.shape
    Ho = (H + 2 - 3) // 2 + 1
    Wo = (W + 2 - 3) // 2 + 1
    # Same broadcast requirement PyTorch enforces in `x * y` (=> H, W <= 2).
    assert Ho in (1, H) and Wo in (1, W), (
        "SALayer: x * conv_sa(x) does not broadcast for this spatial size "
        "(requires H, W <= 2)")

    S = H * W
    L = C * S

    if channel_tile is None:
        channel_tile = _pick_channel_tile(C, S)
    Ct = channel_tile
    assert C % Ct == 0
    n_ct = C // Ct

    if params is None:
        params = prepare_sa_params(weight, bias, H, W, Ct)
    wblocks, bvec = params

    # Free reshape of the contiguous NCHW buffer — no transpose, no extra HBM pass.
    x2d = x_nchw.reshape(N, L)

    vmem_cap = _vmem_capacity_bytes()
    small_vmem = vmem_cap <= (64 << 20)           # v7x-class: 64 MiB / TC, 2 TCs
    vmem_limit = (48 << 20) if small_vmem else (64 << 20)

    bt = _pick_batch_tile(N, Ct * S * x_nchw.dtype.itemsize, small_vmem)
    grid = (pl.cdiv(N, bt), n_ct)

    # NOTE: weight/bias blocks are constant per channel-tile and tiny (<= ~512 KiB
    # bf16), so default double-buffering costs negligible VMEM; single-buffering
    # them (pl.Buffered(1)) is not worth the compile-surface risk here.
    # TODO(synk): add input_output_aliases={0: 0} once callers donate x (the op is
    # elementwise-in-place-safe under the blocked pipeline).
    out2d = pl.pallas_call(
        sa_kernel,
        out_shape=jax.ShapeDtypeStruct((N, L), x_nchw.dtype),
        grid=grid,
        in_specs=[
            pl.BlockSpec((bt, Ct * S), lambda i, c: (i, c)),
            pl.BlockSpec((1, Ct * S, Ct * S), lambda i, c: (c, 0, 0)),
            pl.BlockSpec((1, Ct * S), lambda i, c: (0, c)),
        ],
        out_specs=pl.BlockSpec((bt, Ct * S), lambda i, c: (i, c)),
        compiler_params=pltpu.CompilerParams(
            dimension_semantics=("parallel", "parallel"),
            vmem_limit_bytes=vmem_limit,
        ),
    )(x2d, wblocks, bvec)

    return out2d.reshape(N, C, H, W)              # free reshape back to NCHW


def sa_layer_reference(x_nchw, weight, bias):
    """Pure-JAX reference mirroring nn.Conv2d(C, C, 3, padding=1, groups=C, stride=2)."""
    C = x_nchw.shape[1]
    y = jax.lax.conv_general_dilated(
        x_nchw, weight,
        window_strides=(2, 2), padding=((1, 1), (1, 1)),
        dimension_numbers=("NCHW", "OIHW", "NCHW"),
        feature_group_count=C,
        precision=jax.lax.Precision.HIGHEST,
    ) + bias[None, :, None, None]
    return x_nchw * y


if __name__ == "__main__":
    key = jax.random.PRNGKey(0)
    k_x, k_w, k_b = jax.random.split(key, 3)

    # Spatial must be <= 2 so that x * conv_sa(x) broadcasts (PyTorch semantics).
    N, C, H, W = 16, 32, 2, 2
    # Round inputs to bf16-representable f32 values so the numerical check is
    # insensitive to the deliberate bf16 MXU-operand cast (products exact in f32).
    x = jax.random.normal(k_x, (N, C, H, W), dtype=jnp.float32)
    x = x.astype(jnp.bfloat16).astype(jnp.float32)
    weight = 0.1 * jax.random.normal(k_w, (C, 1, 3, 3), dtype=jnp.float32)
    weight = weight.astype(jnp.bfloat16).astype(jnp.float32)
    bias = 0.1 * jax.random.normal(k_b, (C,), dtype=jnp.float32)
    bias = bias.astype(jnp.bfloat16).astype(jnp.float32)

    ref = jax.block_until_ready(sa_layer_reference(x, weight, bias))

    # Prep once (hoisted out of the per-call path), then run the kernel.
    Ct = _pick_channel_tile(C, H * W)
    params = prepare_sa_params(weight, bias, H, W, Ct)
    out = jax.block_until_ready(
        sa_layer(x, weight, bias, params=params, channel_tile=Ct))

    assert out.shape == x.shape
    assert jnp.allclose(out, ref, atol=1e-5, rtol=1e-5), "mismatch vs reference"
    print("KERNEL_OK")
</pallas_src>

<mosaic_0001>
module attributes {stable_mosaic.version = 11 : i64} {
  func.func @sa_kernel(%arg0: i32, %arg1: i32, %arg2: memref<16x128xf32, #tpu.memory_space<vmem>>, %arg3: memref<1x128x128xbf16, #tpu.memory_space<vmem>>, %arg4: memref<1x128xf32, #tpu.memory_space<vmem>>, %arg5: memref<16x128xf32, #tpu.memory_space<vmem>>) attributes {dimension_semantics = [#tpu.dimension_semantics<parallel>, #tpu.dimension_semantics<parallel>], iteration_bounds = array<i64: 1, 1>, scalar_prefetch = 0 : i64, scratch_operands = 0 : i64, tpu.core_type = #tpu.core_type<tc>, window_params = [{transform_indices = @transform_0, window_bounds = array<i64: 16, 128>}, {transform_indices = @transform_1, window_bounds = array<i64: 1, 128, 128>}, {transform_indices = @transform_2, window_bounds = array<i64: 1, 128>}, {transform_indices = @transform_3, window_bounds = array<i64: 16, 128>}]} {
    %c0 = arith.constant 0 : index
    %c0_0 = arith.constant 0 : index
    %0 = vector.load %arg2[%c0, %c0_0] : memref<16x128xf32, #tpu.memory_space<vmem>>, vector<16x128xf32>
    %1 = arith.truncf %0 : vector<16x128xf32> to vector<16x128xbf16>
    %c0_1 = arith.constant 0 : index
    %c0_2 = arith.constant 0 : index
    %c0_3 = arith.constant 0 : index
    %2 = vector.load %arg3[%c0_1, %c0_2, %c0_3] : memref<1x128x128xbf16, #tpu.memory_space<vmem>>, vector<1x128x128xbf16>
    %3 = vector.shape_cast %2 : vector<1x128x128xbf16> to vector<128x128xbf16>
    %cst = arith.constant dense<0.000000e+00> : vector<16x128xf32>
    %4 = tpu.matmul %1, %3, %cst {dimension_numbers = #tpu.dot_dimension_numbers<[1], [0], [0], [1], [0, 0, 1, 1], [], []>} : vector<16x128xbf16>, vector<128x128xbf16>, vector<16x128xf32> -> vector<16x128xf32>
    %c0_4 = arith.constant 0 : index
    %c0_5 = arith.constant 0 : index
    %5 = vector.load %arg4[%c0_4, %c0_5] : memref<1x128xf32, #tpu.memory_space<vmem>>, vector<1x128xf32>
    %6 = vector.broadcast %5 : vector<1x128xf32> to vector<16x128xf32>
    %7 = arith.addf %4, %6 : vector<16x128xf32>
    %8 = arith.mulf %0, %7 : vector<16x128xf32>
    %c0_6 = arith.constant 0 : index
    %c0_7 = arith.constant 0 : index
    %9 = vector.load %arg5[%c0_6, %c0_7] : memref<16x128xf32, #tpu.memory_space<vmem>>, vector<16x128xf32>
    tpu.vector_store %arg5[%c0_6, %c0_7], %8 {strides = array<i32>} : memref<16x128xf32, #tpu.memory_space<vmem>>, vector<16x128xf32>,
    return
  }
  func.func @transform_0(%arg0: i32, %arg1: i32) -> (i32, i32) {
    %c0_i32 = arith.constant 0 : i32
    return %arg0, %arg1 : i32, i32
  }
  func.func @transform_1(%arg0: i32, %arg1: i32) -> (i32, i32, i32) {
    %c0_i32 = arith.constant 0 : i32
    %c0_i32_0 = arith.constant 0 : i32
    %c0_i32_1 = arith.constant 0 : i32
    return %arg1, %c0_i32, %c0_i32_0 : i32, i32, i32
  }
  func.func @transform_2(%arg0: i32, %arg1: i32) -> (i32, i32) {
    %c0_i32 = arith.constant 0 : i32
    %c0_i32_0 = arith.constant 0 : i32
    return %c0_i32, %arg1 : i32, i32
  }
  func.func @transform_3(%arg0: i32, %arg1: i32) -> (i32, i32) {
    %c0_i32 = arith.constant 0 : i32
    return %arg0, %arg1 : i32, i32
  }
}

</mosaic_0001>

<llo_original>
// kernel: tpu_custom_call.1
$region0: #{tpu_custom_call.1}
  #allocation0 [shape = 'u32[]', space=smem, size = 0x4, offset = 0x4, fixed_abs, tag = 'smem constant byte address 0x4 - core index']
  #allocation1 [shape = 'u32[72,128]{1,0:T(1,128)}', space=vmem, size = 0x9000, scoped, tag = 'internal scratch']
  %s0 = inlined_call_operand.hbm [shape: f32[16,128], index: 0, kind: input, shape index: {}]
  %s1 = inlined_call_operand.hbm [shape: bf16[1,128,128], index: 1, kind: input, shape index: {}]
  %s2 = inlined_call_operand.vmem [shape: f32[1,128], index: 2, kind: input, shape index: {}]
  %s3 = inlined_call_operand.hbm [shape: f32[16,128], index: 3, kind: output, shape index: {}]
  %s4 = sld [smem:[#allocation0]]
  $region30: #{tpu_custom_call.1} parent=0
    _
  %s6 = ssub.s32 1, %s4
  %s7 = scalar_select 0, %s6, %s4
  $region1: #{tpu_custom_call.1} parent=0
    #allocation2 [shape = 'u8[8192]{0}', space=vmem, size = 0x2000, scoped, tag = 'input window, operand 0, single buffered']
    #allocation3 [shape = 's32[1]{0}', space=sflag, size = 0x4, scoped, tag = 'scoped memory for tpu_custom_call.1']
    #allocation4 [shape = 's32[1]{0}', space=sflag, size = 0x4, scoped, tag = 'scoped memory for tpu_custom_call.1']
    #allocation5 [shape = 'u8[32768]{0}', space=vmem, size = 0x8000, scoped, tag = 'input window, operand 1, single buffered']
    #allocation6 [shape = 's32[1]{0}', space=sflag, size = 0x4, scoped, tag = 'scoped memory for tpu_custom_call.1']
    #allocation7 [shape = 'u8[8192]{0}', space=vmem, size = 0x2000, scoped, tag = 'output window, operand 0, single buffered']
    %8 = vsyncpa [#allocation3], 0
    %9 = vsyncpa [#allocation6], 0
    %10 = vsyncpa [#allocation4], 0
    // Predicated region
    $region2: #{tpu_custom_call.1} parent=1 // pred_check
      _
    $region3: #{tpu_custom_call.1} parent=1 // pred_check_branch
      %12 = sbr.rel (0) target = $region5
    $region4: #{tpu_custom_call.1} parent=1 // pred_region
      %14 = vsyncadd [#allocation3], 0
      %s15 = sshll.u32 %s0, 4
      %s16 = int_to_ptr.hbm [resolvable:$true] %s15
      %s17 = sshll.u32 [#allocation2], 4
      %s18 = int_to_ptr.vmem [resolvable:$true] %s17
      %23 = dma.hbm_to_vmem [thread:$0]  %s16, 256, %s18, [#allocation3], 128, 128, 8
    $region5: #{tpu_custom_call.1} parent=1 // pred_fallthru
      _
    // Predicated region
    $region6: #{tpu_custom_call.1} parent=1 // pred_check
      _
    $region7: #{tpu_custom_call.1} parent=1 // pred_check_branch
      %25 = sbr.rel (0) target = $region9
    $region8: #{tpu_custom_call.1} parent=1 // pred_region
      %27 = vsyncadd [#allocation6], 0
      %s28 = sshll.u32 %s1, 4
      %s29 = int_to_ptr.hbm [resolvable:$true] %s28
      %s30 = sshll.u32 [#allocation5], 4
      %s31 = int_to_ptr.vmem [resolvable:$true] %s30
      %36 = dma.hbm_to_vmem [thread:$0]  %s29, 1024, %s31, [#allocation6], 64, 64, 4
    $region9: #{tpu_custom_call.1} parent=1 // pred_fallthru
      _
    // Predicated region
    $region10: #{tpu_custom_call.1} parent=1 // pred_check
      _
    $region11: #{tpu_custom_call.1} parent=1 // pred_check_branch
      %38 = sbr.rel (0) target = $region13
    $region12: #{tpu_custom_call.1} parent=1 // pred_region
      _
    $region13: #{tpu_custom_call.1} parent=1 // pred_fallthru
      _
    // Predicated region
    $region14: #{tpu_custom_call.1} parent=1 // pred_check
      _
    $region15: #{tpu_custom_call.1} parent=1 // pred_check_branch
      %40 = sbr.rel (0) target = $region17
    $region16: #{tpu_custom_call.1} parent=1 // pred_region
      %42 = dma.done [#allocation3], 256
    $region17: #{tpu_custom_call.1} parent=1 // pred_fallthru
      _
    // Predicated region
    $region18: #{tpu_custom_call.1} parent=1 // pred_check
      _
    $region19: #{tpu_custom_call.1} parent=1 // pred_check_branch
      %44 = sbr.rel (0) target = $region21
    $region20: #{tpu_custom_call.1} parent=1 // pred_region
      %46 = dma.done [#allocation6], 1024
    $region21: #{tpu_custom_call.1} parent=1 // pred_fallthru
      _
    %v47 = vld [vmem:[#allocation2] sm:$0xff]
    %v48 = vld [vmem:[#allocation2 + $0x8] sm:$0xff]
    %v49 = vpack.c.bf16 %v48, %v47
    %v50 = vld [vmem:[#allocation5] sm:$0xf]
    %v51 = vld [vmem:[#allocation5 + $0x4] sm:$0xf]
    %v52 = vld [vmem:[#allocation5 + $0x8] sm:$0xf]
    %v53 = vld [vmem:[#allocation5 + $0xc] sm:$0xf]
    %v54 = vld [vmem:[#allocation5 + $0x10] sm:$0xf]
    %v55 = vld [vmem:[#allocation5 + $0x14] sm:$0xf]
    %v56 = vld [vmem:[#allocation5 + $0x18] sm:$0xf]
    %v57 = vld [vmem:[#allocation5 + $0x1c] sm:$0xf]
    %v58 = vld [vmem:[#allocation5 + $0x20] sm:$0xf]
    %v59 = vld [vmem:[#allocation5 + $0x24] sm:$0xf]
    %v60 = vld [vmem:[#allocation5 + $0x28] sm:$0xf]
    %v61 = vld [vmem:[#allocation5 + $0x2c] sm:$0xf]
    %v62 = vld [vmem:[#allocation5 + $0x30] sm:$0xf]
    %v63 = vld [vmem:[#allocation5 + $0x34] sm:$0xf]
    %v64 = vld [vmem:[#allocation5 + $0x38] sm:$0xf]
    %v65 = vld [vmem:[#allocation5 + $0x3c] sm:$0xf]
    %v66 = vld [vmem:[%s2] sm:$0x1]
    %v68 = vperm.slane %v66, 0
    %v86 = vunpack.c.l.b16 %v50
    %v87 = vunpack.c.l.b16 %v51
    %v88 = vunpack.c.l.b16 %v52
    %v89 = vunpack.c.l.b16 %v53
    %v90 = vunpack.c.l.b16 %v54
    %v91 = vunpack.c.l.b16 %v55
    %v92 = vunpack.c.l.b16 %v56
    %v93 = vunpack.c.l.b16 %v57
    %v94 = vunpack.c.l.b16 %v58
    %v95 = vunpack.c.l.b16 %v59
    %v96 = vunpack.c.l.b16 %v60
    %v97 = vunpack.c.l.b16 %v61
    %v98 = vunpack.c.l.b16 %v62
    %v99 = vunpack.c.l.b16 %v63
    %v100 = vunpack.c.l.b16 %v64
    %v101 = vunpack.c.l.b16 %v65
    %v102 = vpack.c.b16 %v87, %v86
    %v103 = vpack.c.b16 %v89, %v88
    %v104 = vpack.c.b16 %v91, %v90
    %v105 = vpack.c.b16 %v93, %v92
    %v106 = vpack.c.b16 %v95, %v94
    %v107 = vpack.c.b16 %v97, %v96
    %v108 = vpack.c.b16 %v99, %v98
    %v109 = vpack.c.b16 %v101, %v100
    %118 = vmatpush.bf16.msra.mxu0 %v109
    %119 = vmatpush.bf16.msra.mxu0 %v108
    %120 = vmatpush.bf16.msra.mxu0 %v107
    %121 = vmatpush.bf16.msra.mxu0 %v106
    %122 = vmatpush.bf16.msra.mxu0 %v105
    %123 = vmatpush.bf16.msra.mxu0 %v104
    %124 = vmatpush.bf16.msra.mxu0 %v103
    %125 = vmatpush.bf16.msra.mxu0 %v102
    %126 = vmatmul.bf16.gmra.mxu0 %v49
    %v127 = vpop.f32.mrf.mxu0
    %v128 = vadd.f32 %v68, %v127
    %v129 = vpop.f32.mrf.mxu0
    %v130 = vadd.f32 %v68, %v129
    %131 = vdwg.mxu0
    %v132 = vmul.f32 %v47, %v128
    %v133 = vmul.f32 %v48, %v130
    %134 = vst [vmem:[#allocation7] sm:$0xff] %v132
    %135 = vst [vmem:[#allocation7 + $0x8] sm:$0xff] %v133
    // Predicated region
    $region22: #{tpu_custom_call.1} parent=1 // pred_check
      _
    $region23: #{tpu_custom_call.1} parent=1 // pred_check_branch
      %137 = sbr.rel (0) target = $region25
    $region24: #{tpu_custom_call.1} parent=1 // pred_region
      %139 = vsyncadd [#allocation4], 0
      %s140 = sshll.u32 [#allocation7], 4
      %s141 = int_to_ptr.vmem [resolvable:$true] %s140
      %s142 = sshll.u32 %s3, 4
      %s143 = int_to_ptr.hbm [resolvable:$true] %s142
      %148 = dma.vmem_to_hbm [thread:$0]  %s141, 256, %s143, [#allocation4], 128, 128, 8
    $region25: #{tpu_custom_call.1} parent=1 // pred_fallthru
      _
    // Predicated region
    $region26: #{tpu_custom_call.1} parent=1 // pred_check
      _
    $region27: #{tpu_custom_call.1} parent=1 // pred_check_branch
      %150 = sbr.rel (0) target = $region29
    $region28: #{tpu_custom_call.1} parent=1 // pred_region
      %152 = dma.done [#allocation4], 256
    $region29: #{tpu_custom_call.1} parent=1 // pred_fallthru
      _
    %153 = vsyncpa [#allocation3], 1
    %154 = vsyncpa [#allocation6], 1
    %155 = vsyncpa [#allocation4], 1

</llo_original>
